<compile_context>
chip_gen: v7x
topology: tpu7x:2x2x1
jax: 0.10.0
libtpu: 0.0.40
codegen_flags: <defaults>
</compile_context>

<pallas_src>
import functools

import jax
import jax.numpy as jnp
from jax.experimental import pallas as pl
from jax.experimental.pallas import tpu as pltpu


def _round_up(n, m):
    return (n + m - 1) // m * m


def _ensemble_conv_kernel(x_ref, w_ref, o_ref, *, KH, S, L):
    """One step for the whole (small) batch.

    x_ref: (B*TPB, Hp*S)  kx-preshifted, lane-aligned (row stride S=128),
                          sublane-stacked blocks (+ ones row carrying the bias).
    w_ref: (B*Cout, K)    batch-block-diagonal ensemble-mean weights (+ bias col).
    o_ref: (B*Cout, L)    ensemble-mean output, pixels on lanes (L = H*S).
    """
    x = x_ref[...]
    # Each ky tap is a whole-vreg slice: lane offset ky*S is a multiple of 128
    # and every piece is 32 rows, so concat boundaries are 8-sublane aligned.
    pieces = [x[:, ky * S: ky * S + L] for ky in range(KH)]
    patches = jnp.concatenate(pieces, axis=0)                   # (K, L)
    o_ref[...] = jnp.dot(w_ref[...], patches,
                         preferred_element_type=jnp.float32).astype(o_ref.dtype)


def ensemble_forward(x_nchw, weights, biases):
    """x_nchw: (B, Cin, H, W); weights: (M, KH, KW, Cin, Cout); biases: (M, Cout)."""
    B, Cin, H, W = x_nchw.shape
    M, KH, KW, _, Cout = weights.shape
    ph, pw = KH // 2, KW // 2
    Hp, Wp = H + 2 * ph, W + 2 * pw

    S = 128                                   # lane-aligned flattened row stride
    assert Wp <= S, "padded row must fit in one 128-lane block"
    L = H * S                                 # output lanes: one 128-block per row
    TPB = _round_up(KW * Cin + 1, 8)          # rows per (batch, ky) block: 12 + ones + pad = 16
    K = KH * B * TPB                          # 3 * 2 * 16 = 96  (<= 128)
    f32 = jnp.float32

    # ---- fold ensemble mean into weights / bias (conv is linear) ----------
    w_mean = jnp.mean(weights.astype(f32), axis=0)      # (KH, KW, Cin, Cout)
    b_mean = jnp.mean(biases.astype(f32), axis=0)       # (Cout,)

    # ---- input layout plumbing (plain XLA glue) ----------------------------
    # SAME zero-pad, pad each row to 128 lanes, flatten row-major, pre-apply
    # the KW lane shifts, append a ones row (bias) + zero pad rows, stack the
    # batch on sublanes.
    x_pad = jnp.pad(x_nchw.astype(f32), ((0, 0), (0, 0), (ph, ph), (pw, pw)))
    x_rows = jnp.pad(x_pad, ((0, 0), (0, 0), (0, 0), (0, S - Wp)))        # (B,Cin,Hp,S)
    x_flat = x_rows.reshape(B, Cin, Hp * S)
    x_ext = jnp.pad(x_flat, ((0, 0), (0, 0), (0, KW - 1)))
    shifted = jnp.stack([x_ext[:, :, kx:kx + Hp * S] for kx in range(KW)],
                        axis=1)                                            # (B,KW,Cin,Hp*S)
    shifted = shifted.reshape(B, KW * Cin, Hp * S)
    ones_row = jnp.ones((B, 1, Hp * S), f32)                               # bias carrier
    pad_rows = jnp.zeros((B, TPB - KW * Cin - 1, Hp * S), f32)
    x_blocks = jnp.concatenate([shifted, ones_row, pad_rows], axis=1)      # (B,TPB,Hp*S)
    x_stacked = x_blocks.reshape(B * TPB, Hp * S)                          # (32, 2304)

    # ---- weights: batch-block-diagonal, mean-folded, bias folded in -------
    wb = jnp.zeros((Cout, KH, TPB), f32)
    wb = wb.at[:, :, :KW * Cin].set(
        jnp.transpose(w_mean, (3, 0, 1, 2)).reshape(Cout, KH, KW * Cin))
    wb = wb.at[:, 0, KW * Cin].set(b_mean)            # bias column (ky=0 only)
    w_full = jnp.zeros((B, Cout, KH, B, TPB), f32)
    for b in range(B):                                # static loop, B=2
        w_full = w_full.at[b, :, :, b, :].set(wb)
    w_full = w_full.reshape(B * Cout, K)              # (8, 96)

    kernel = functools.partial(_ensemble_conv_kernel, KH=KH, S=S, L=L)

    out_lanes = pl.pallas_call(
        kernel,
        out_shape=jax.ShapeDtypeStruct((B * Cout, L), jnp.float32),
        grid_spec=pltpu.PrefetchScalarGridSpec(
            num_scalar_prefetch=0,
            grid=(1,),
            in_specs=[
                pl.BlockSpec((B * TPB, Hp * S), lambda i: (0, 0)),
                pl.BlockSpec((B * Cout, K), lambda i: (0, 0)),
            ],
            out_specs=pl.BlockSpec((B * Cout, L), lambda i: (0, 0)),
        ),
        compiler_params=pltpu.CompilerParams(
            dimension_semantics=("arbitrary",)),
    )(x_stacked, w_full)

    # Output is already NCHW-ordered; drop the lane-pad columns, no transpose.
    out = out_lanes.reshape(B, Cout, H, S)[:, :, :, :W]
    return out


def _reference(x_nchw, weights, biases):
    """Pure-JAX reference: per-model conv + bias, stack, mean over model axis."""
    M = weights.shape[0]
    outs = []
    for m in range(M):
        w_oihw = jnp.transpose(weights[m], (3, 2, 0, 1))   # (Cout, Cin, KH, KW)
        y = jax.lax.conv_general_dilated(
            x_nchw, w_oihw, window_strides=(1, 1), padding="SAME",
            dimension_numbers=("NCHW", "OIHW", "NCHW"))
        outs.append(y + biases[m][None, :, None, None])
    return jnp.mean(jnp.stack(outs, axis=0), axis=0)


if __name__ == "__main__":
    key = jax.random.PRNGKey(0)
    B, Cin, H, W = 2, 4, 16, 16            # in_channels=4 per the module
    Cout, KH, KW, M = 4, 3, 3, 3           # classes=4, 3 ensemble members

    kx_, kw_, kb_ = jax.random.split(key, 3)
    x = jax.random.normal(kx_, (B, Cin, H, W), dtype=jnp.float32)
    weights = 0.1 * jax.random.normal(kw_, (M, KH, KW, Cin, Cout), dtype=jnp.float32)
    biases = 0.1 * jax.random.normal(kb_, (M, Cout), dtype=jnp.float32)

    out = jax.block_until_ready(ensemble_forward(x, weights, biases))
    ref = jax.block_until_ready(_reference(x, weights, biases))

    assert out.shape == (B, Cout, H, W), out.shape
    assert jnp.allclose(out, ref, atol=1e-4, rtol=1e-4), \
        float(jnp.max(jnp.abs(out - ref)))

    print("KERNEL_OK")
</pallas_src>

<mosaic_0001>
module attributes {stable_mosaic.version = 11 : i64} {
  func.func @_ensemble_conv_kernel(%arg0: i32, %arg1: memref<32x2304xf32, #tpu.memory_space<vmem>>, %arg2: memref<8x96xf32, #tpu.memory_space<vmem>>, %arg3: memref<8x2048xf32, #tpu.memory_space<vmem>>) attributes {dimension_semantics = [#tpu.dimension_semantics<arbitrary>], iteration_bounds = array<i64: 1>, scalar_prefetch = 0 : i64, scratch_operands = 0 : i64, tpu.core_type = #tpu.core_type<tc>, window_params = [{pipeline_mode = #tpu.pipeline_mode<synchronous>, transform_indices = @transform_0, window_bounds = array<i64: 32, 2304>}, {pipeline_mode = #tpu.pipeline_mode<synchronous>, transform_indices = @transform_1, window_bounds = array<i64: 8, 96>}, {pipeline_mode = #tpu.pipeline_mode<synchronous>, transform_indices = @transform_2, window_bounds = array<i64: 8, 2048>}]} {
    %c0 = arith.constant 0 : index
    %c0_0 = arith.constant 0 : index
    %0 = vector.load %arg1[%c0, %c0_0] : memref<32x2304xf32, #tpu.memory_space<vmem>>, vector<32x2304xf32>
    %1 = vector.extract_strided_slice %0 {offsets = [0, 0], sizes = [32, 2048], strides = [1, 1]} : vector<32x2304xf32> to vector<32x2048xf32>
    %2 = vector.extract_strided_slice %0 {offsets = [0, 128], sizes = [32, 2048], strides = [1, 1]} : vector<32x2304xf32> to vector<32x2048xf32>
    %3 = vector.extract_strided_slice %0 {offsets = [0, 256], sizes = [32, 2048], strides = [1, 1]} : vector<32x2304xf32> to vector<32x2048xf32>
    %4 = tpu.concatenate %1, %2, %3 in 0 : vector<32x2048xf32>, vector<32x2048xf32>, vector<32x2048xf32> -> vector<96x2048xf32>
    %c0_1 = arith.constant 0 : index
    %c0_2 = arith.constant 0 : index
    %5 = vector.load %arg2[%c0_1, %c0_2] : memref<8x96xf32, #tpu.memory_space<vmem>>, vector<8x96xf32>
    %cst = arith.constant dense<0.000000e+00> : vector<8x2048xf32>
    %6 = tpu.matmul %5, %4, %cst {dimension_numbers = #tpu.dot_dimension_numbers<[1], [0], [0], [1], [0, 0, 1, 1], [], []>} : vector<8x96xf32>, vector<96x2048xf32>, vector<8x2048xf32> -> vector<8x2048xf32>
    %c0_3 = arith.constant 0 : index
    %c0_4 = arith.constant 0 : index
    %7 = vector.load %arg3[%c0_3, %c0_4] : memref<8x2048xf32, #tpu.memory_space<vmem>>, vector<8x2048xf32>
    tpu.vector_store %arg3[%c0_3, %c0_4], %6 {strides = array<i32>} : memref<8x2048xf32, #tpu.memory_space<vmem>>, vector<8x2048xf32>,
    return
  }
  func.func @transform_0(%arg0: i32) -> (i32, i32) {
    %c0_i32 = arith.constant 0 : i32
    %c0_i32_0 = arith.constant 0 : i32
    %c0_i32_1 = arith.constant 0 : i32
    return %c0_i32, %c0_i32_0 : i32, i32
  }
  func.func @transform_1(%arg0: i32) -> (i32, i32) {
    %c0_i32 = arith.constant 0 : i32
    %c0_i32_0 = arith.constant 0 : i32
    %c0_i32_1 = arith.constant 0 : i32
    return %c0_i32, %c0_i32_0 : i32, i32
  }
  func.func @transform_2(%arg0: i32) -> (i32, i32) {
    %c0_i32 = arith.constant 0 : i32
    %c0_i32_0 = arith.constant 0 : i32
    %c0_i32_1 = arith.constant 0 : i32
    return %c0_i32, %c0_i32_0 : i32, i32
  }
}

</mosaic_0001>

<llo_original>
// kernel: tpu_custom_call.1
$region0: #{tpu_custom_call.1}
  #allocation0 [shape = 'u32[]', space=smem, size = 0x4, offset = 0x4, fixed_abs, tag = 'smem constant byte address 0x4 - core index']
  #allocation1 [shape = 'u32[144,128]{1,0:T(1,128)}', space=vmem, size = 0x12000, scoped, tag = 'internal scratch']
  %s0 = inlined_call_operand.hbm [shape: f32[32,2304], index: 0, kind: input, shape index: {}]
  %s1 = inlined_call_operand.hbm [shape: f32[8,96], index: 1, kind: input, shape index: {}]
  %s2 = inlined_call_operand.hbm [shape: f32[8,2048], index: 2, kind: output, shape index: {}]
  %s3 = sld [smem:[#allocation0]]
  $region26: #{tpu_custom_call.1} parent=0
    _
  %s5 = ssub.s32 1, %s3
  %s6 = scalar_select 0, %s5, %s3
  $region1: #{tpu_custom_call.1} parent=0
    #allocation2 [shape = 'u8[294912]{0}', space=vmem, size = 0x48000, scoped, tag = 'input window, operand 0, single buffered']
    #allocation3 [shape = 's32[1]{0}', space=sflag, size = 0x4, scoped, tag = 'scoped memory for tpu_custom_call.1']
    #allocation4 [shape = 's32[1]{0}', space=sflag, size = 0x4, scoped, tag = 'scoped memory for tpu_custom_call.1']
    #allocation5 [shape = 'u8[4096]{0}', space=vmem, size = 0x1000, scoped, tag = 'input window, operand 1, single buffered']
    #allocation6 [shape = 's32[1]{0}', space=sflag, size = 0x4, scoped, tag = 'scoped memory for tpu_custom_call.1']
    #allocation7 [shape = 'u8[65536]{0}', space=vmem, size = 0x10000, scoped, tag = 'output window, operand 0, single buffered']
    %7 = vsyncpa [#allocation3], 0
    %8 = vsyncpa [#allocation6], 0
    %9 = vsyncpa [#allocation4], 0
    // Predicated region
    $region2: #{tpu_custom_call.1} parent=1 // pred_check
      _
    $region3: #{tpu_custom_call.1} parent=1 // pred_check_branch
      %11 = sbr.rel (0) target = $region5
    $region4: #{tpu_custom_call.1} parent=1 // pred_region
      %s13 = ssub.s32 9216, 9216
      %14 = vsyncadd [#allocation3], %s13
      %s15 = sshll.u32 [#allocation2], 4
      %s16 = int_to_ptr.vmem [resolvable:$true] %s15
      %21 = dma.hbm_to_vmem [thread:$0]  %s0, 9216, %s16, [#allocation3], 2304, 2304, 144
    $region5: #{tpu_custom_call.1} parent=1 // pred_fallthru
      _
    // Predicated region
    $region6: #{tpu_custom_call.1} parent=1 // pred_check
      _
    $region7: #{tpu_custom_call.1} parent=1 // pred_check_branch
      %23 = sbr.rel (0) target = $region9
    $region8: #{tpu_custom_call.1} parent=1 // pred_region
      %s25 = ssub.s32 128, 128
      %26 = vsyncadd [#allocation6], %s25
      %s28 = sshll.u32 [#allocation5], 4
      %s29 = int_to_ptr.vmem [resolvable:$true] %s28
      %31 = dma.hbm_to_vmem [thread:$0]  %s1, 128, %s29, [#allocation6]
    $region9: #{tpu_custom_call.1} parent=1 // pred_fallthru
      _
    // Predicated region
    $region10: #{tpu_custom_call.1} parent=1 // pred_check
      _
    $region11: #{tpu_custom_call.1} parent=1 // pred_check_branch
      %33 = sbr.rel (0) target = $region13
    $region12: #{tpu_custom_call.1} parent=1 // pred_region
      %34 = dma.done [#allocation3], 9216
    $region13: #{tpu_custom_call.1} parent=1 // pred_fallthru
      _
    // Predicated region
    $region14: #{tpu_custom_call.1} parent=1 // pred_check
      _
    $region15: #{tpu_custom_call.1} parent=1 // pred_check_branch
      %36 = sbr.rel (0) target = $region17
    $region16: #{tpu_custom_call.1} parent=1 // pred_region
      %37 = dma.done [#allocation6], 128
    $region17: #{tpu_custom_call.1} parent=1 // pred_fallthru
      _
    %v38 = vld [vmem:[#allocation2] sm:$0xff]
    %v39 = vld [vmem:[#allocation2 + $0x8] sm:$0xff]
    %v40 = vld [vmem:[#allocation2 + $0x10] sm:$0xff]
    %v41 = vld [vmem:[#allocation2 + $0x18] sm:$0xff]
    %v42 = vld [vmem:[#allocation2 + $0x20] sm:$0xff]
    %v43 = vld [vmem:[#allocation2 + $0x28] sm:$0xff]
    %v44 = vld [vmem:[#allocation2 + $0x30] sm:$0xff]
    %v45 = vld [vmem:[#allocation2 + $0x38] sm:$0xff]
    %v46 = vld [vmem:[#allocation2 + $0x40] sm:$0xff]
    %v47 = vld [vmem:[#allocation2 + $0x48] sm:$0xff]
    %v48 = vld [vmem:[#allocation2 + $0x50] sm:$0xff]
    %v49 = vld [vmem:[#allocation2 + $0x58] sm:$0xff]
    %v50 = vld [vmem:[#allocation2 + $0x60] sm:$0xff]
    %v51 = vld [vmem:[#allocation2 + $0x68] sm:$0xff]
    %v52 = vld [vmem:[#allocation2 + $0x70] sm:$0xff]
    %v53 = vld [vmem:[#allocation2 + $0x78] sm:$0xff]
    %v54 = vld [vmem:[#allocation2 + $0x80] sm:$0xff]
    %v55 = vld [vmem:[#allocation2 + $0x88] sm:$0xff]
    %v56 = vld [vmem:[#allocation2 + $0x90] sm:$0xff]
    %v57 = vld [vmem:[#allocation2 + $0x98] sm:$0xff]
    %v58 = vld [vmem:[#allocation2 + $0xa0] sm:$0xff]
    %v59 = vld [vmem:[#allocation2 + $0xa8] sm:$0xff]
    %v60 = vld [vmem:[#allocation2 + $0xb0] sm:$0xff]
    %v61 = vld [vmem:[#allocation2 + $0xb8] sm:$0xff]
    %v62 = vld [vmem:[#allocation2 + $0xc0] sm:$0xff]
    %v63 = vld [vmem:[#allocation2 + $0xc8] sm:$0xff]
    %v64 = vld [vmem:[#allocation2 + $0xd0] sm:$0xff]
    %v65 = vld [vmem:[#allocation2 + $0xd8] sm:$0xff]
    %v66 = vld [vmem:[#allocation2 + $0xe0] sm:$0xff]
    %v67 = vld [vmem:[#allocation2 + $0xe8] sm:$0xff]
    %v68 = vld [vmem:[#allocation2 + $0xf0] sm:$0xff]
    %v69 = vld [vmem:[#allocation2 + $0xf8] sm:$0xff]
    %v70 = vld [vmem:[#allocation2 + $0x100] sm:$0xff]
    %v71 = vld [vmem:[#allocation2 + $0x108] sm:$0xff]
    %v72 = vld [vmem:[#allocation2 + $0x110] sm:$0xff]
    %v73 = vld [vmem:[#allocation2 + $0x118] sm:$0xff]
    %v74 = vld [vmem:[#allocation2 + $0x120] sm:$0xff]
    %v75 = vld [vmem:[#allocation2 + $0x128] sm:$0xff]
    %v76 = vld [vmem:[#allocation2 + $0x130] sm:$0xff]
    %v77 = vld [vmem:[#allocation2 + $0x138] sm:$0xff]
    %v78 = vld [vmem:[#allocation2 + $0x140] sm:$0xff]
    %v79 = vld [vmem:[#allocation2 + $0x148] sm:$0xff]
    %v80 = vld [vmem:[#allocation2 + $0x150] sm:$0xff]
    %v81 = vld [vmem:[#allocation2 + $0x158] sm:$0xff]
    %v82 = vld [vmem:[#allocation2 + $0x160] sm:$0xff]
    %v83 = vld [vmem:[#allocation2 + $0x168] sm:$0xff]
    %v84 = vld [vmem:[#allocation2 + $0x170] sm:$0xff]
    %v85 = vld [vmem:[#allocation2 + $0x178] sm:$0xff]
    %v86 = vld [vmem:[#allocation2 + $0x180] sm:$0xff]
    %v87 = vld [vmem:[#allocation2 + $0x188] sm:$0xff]
    %v88 = vld [vmem:[#allocation2 + $0x190] sm:$0xff]
    %v89 = vld [vmem:[#allocation2 + $0x198] sm:$0xff]
    %v90 = vld [vmem:[#allocation2 + $0x1a0] sm:$0xff]
    %v91 = vld [vmem:[#allocation2 + $0x1a8] sm:$0xff]
    %v92 = vld [vmem:[#allocation2 + $0x1b0] sm:$0xff]
    %v93 = vld [vmem:[#allocation2 + $0x1b8] sm:$0xff]
    %v94 = vld [vmem:[#allocation2 + $0x1c0] sm:$0xff]
    %v95 = vld [vmem:[#allocation2 + $0x1c8] sm:$0xff]
    %v96 = vld [vmem:[#allocation2 + $0x1d0] sm:$0xff]
    %v97 = vld [vmem:[#allocation2 + $0x1d8] sm:$0xff]
    %v98 = vld [vmem:[#allocation2 + $0x1e0] sm:$0xff]
    %v99 = vld [vmem:[#allocation2 + $0x1e8] sm:$0xff]
    %v100 = vld [vmem:[#allocation2 + $0x1f0] sm:$0xff]
    %v101 = vld [vmem:[#allocation2 + $0x1f8] sm:$0xff]
    %v102 = vld [vmem:[#allocation2 + $0x200] sm:$0xff]
    %v103 = vld [vmem:[#allocation2 + $0x208] sm:$0xff]
    %v104 = vld [vmem:[#allocation2 + $0x210] sm:$0xff]
    %v105 = vld [vmem:[#allocation2 + $0x218] sm:$0xff]
    %v106 = vld [vmem:[#allocation2 + $0x220] sm:$0xff]
    %v107 = vld [vmem:[#allocation2 + $0x228] sm:$0xff]
    %v108 = vld [vmem:[#allocation2 + $0x230] sm:$0xff]
    %v109 = vld [vmem:[#allocation2 + $0x238] sm:$0xff]
    %v110 = vld [vmem:[#allocation5] sm:$0xff]
    %vm111 = vcmask 785408
    %v113 = vsel %vm111, %v110, 0
    %115 = vmatprep.subr.mxu0 %v39
    %116 = vmatpush1.msra.mxu0 %v38
    %117 = vmatprep.subr.mxu0 %v57
    %118 = vmatpush1.msra.mxu0 %v56
    %119 = vmatprep.subr.mxu0 %v75
    %120 = vmatpush1.msra.mxu0 %v74
    %121 = vmatprep.subr.mxu0 %v93
    %122 = vmatpush1.msra.mxu0 %v92
    %123 = vmatprep.subr.mxu0 %v40
    %124 = vmatpush1.msra.mxu0 %v39
    %125 = vmatprep.subr.mxu0 %v58
    %126 = vmatpush1.msra.mxu0 %v57
    %127 = vmatprep.subr.mxu0 %v76
    %128 = vmatpush1.msra.mxu0 %v75
    %129 = vmatprep.subr.mxu0 %v94
    %130 = vmatpush1.msra.mxu0 %v93
    %131 = vmatprep.subr.mxu0 %v41
    %132 = vmatpush1.msra.mxu0 %v40
    %133 = vmatprep.subr.mxu0 %v59
    %134 = vmatpush1.msra.mxu0 %v58
    %135 = vmatprep.subr.mxu0 %v77
    %136 = vmatpush1.msra.mxu0 %v76
    %137 = vmatprep.subr.mxu0 %v95
    %138 = vmatpush1.msra.mxu0 %v94
    %139 = vmatprep.subr.mxu0 0.0
    %140 = vmatpush1.msra.mxu0 0.0
    %141 = vmatprep.subr.mxu0 0.0
    %142 = vmatpush1.msra.mxu0 0.0
    %143 = vmatprep.subr.mxu0 0.0
    %144 = vmatpush1.msra.mxu0 0.0
    %145 = vmatprep.subr.mxu0 0.0
    %146 = vmatpush1.msra.mxu0 0.0
    %147 = vmatprep.subr.mxu0 0.0
    %148 = vmatpush1.msra.mxu0 0.0
    %149 = vmatprep.subr.mxu0 0.0
    %150 = vmatpush1.msra.mxu0 0.0
    %151 = vmatprep.subr.mxu0 0.0
    %152 = vmatpush1.msra.mxu0 0.0
    %153 = vmatprep.subr.mxu0 0.0
    %154 = vmatpush1.msra.mxu0 0.0
    %155 = vmatprep.subr.mxu0 0.0
    %156 = vmatpush1.msra.mxu0 0.0
    %157 = vmatprep.subr.mxu0 0.0
    %158 = vmatpush1.msra.mxu0 0.0
    %159 = vmatprep.subr.mxu0 0.0
    %160 = vmatpush1.msra.mxu0 0.0
    %161 = vmatprep.subr.mxu0 0.0
    %162 = vmatpush1.msra.mxu0 0.0
    %163 = vmatprep.subr.mxu0 0.0
    %164 = vmatpush1.msra.mxu0 0.0
    %165 = vmatprep.subr.mxu0 0.0
    %166 = vmatpush1.msra.mxu0 0.0
    %167 = vmatprep.subr.mxu0 0.0
    %168 = vmatpush1.msra.mxu0 0.0
    %169 = vmatprep.subr.mxu0 0.0
    %170 = vmatpush1.msra.mxu0 0.0
    %171 = vmatprep.subr.mxu0 0.0
    %172 = vmatpush1.msra.mxu0 0.0
    %173 = vmatprep.subr.mxu0 0.0
    %174 = vmatpush1.msra.mxu0 0.0
    %175 = vmatprep.subr.mxu0 0.0
    %176 = vmatpush1.msra.mxu0 0.0
    %177 = vmatprep.subr.mxu0 0.0
    %178 = vmatpush1.msra.mxu0 0.0
    %179 = vmatprep.mubr.f32.mxu0 0.0
    %180 = vmatmul.mubr.f32.gmra.mrb[0].mxu0 %v113
    %v181 = vpop.f32.mrb[0].mxu0
    %v182 = vadd.f32 0.0, %v181
    %v183 = vpop.f32.mrb[0].mxu0
    %v184 = vadd.f32 0.0, %v183
    %185 = vdwg.mxu0
    %186 = vmatprep.subr.mxu0 %v41
    %187 = vmatpush1.msra.mxu0 %v40
    %188 = vmatprep.subr.mxu0 %v59
    %189 = vmatpush1.msra.mxu0 %v58
    %190 = vmatprep.subr.mxu0 %v77
    %191 = vmatpush1.msra.mxu0 %v76
    %192 = vmatprep.subr.mxu0 %v95
    %193 = vmatpush1.msra.mxu0 %v94
    %194 = vmatprep.subr.mxu0 %v42
    %195 = vmatpush1.msra.mxu0 %v41
    %196 = vmatprep.subr.mxu0 %v60
    %197 = vmatpush1.msra.mxu0 %v59
    %198 = vmatprep.subr.mxu0 %v78
    %199 = vmatpush1.msra.mxu0 %v77
    %200 = vmatprep.subr.mxu0 %v96
    %201 = vmatpush1.msra.mxu0 %v95
    %202 = vmatprep.subr.mxu0 %v43
    %203 = vmatpush1.msra.mxu0 %v42
    %204 = vmatprep.subr.mxu0 %v61
    %205 = vmatpush1.msra.mxu0 %v60
    %206 = vmatprep.subr.mxu0 %v79
    %207 = vmatpush1.msra.mxu0 %v78
    %208 = vmatprep.subr.mxu0 %v97
    %209 = vmatpush1.msra.mxu0 %v96
    %210 = vmatprep.subr.mxu0 0.0
    %211 = vmatpush1.msra.mxu0 0.0
    %212 = vmatprep.subr.mxu0 0.0
    %213 = vmatpush1.msra.mxu0 0.0
    %214 = vmatprep.subr.mxu0 0.0
    %215 = vmatpush1.msra.mxu0 0.0
    %216 = vmatprep.subr.mxu0 0.0
    %217 = vmatpush1.msra.mxu0 0.0
    %218 = vmatprep.subr.mxu0 0.0
    %219 = vmatpush1.msra.mxu0 0.0
    %220 = vmatprep.subr.mxu0 0.0
    %221 = vmatpush1.msra.mxu0 0.0
    %222 = vmatprep.subr.mxu0 0.0
    %223 = vmatpush1.msra.mxu0 0.0
    %224 = vmatprep.subr.mxu0 0.0
    %225 = vmatpush1.msra.mxu0 0.0
    %226 = vmatprep.subr.mxu0 0.0
    %227 = vmatpush1.msra.mxu0 0.0
    %228 = vmatprep.subr.mxu0 0.0
    %229 = vmatpush1.msra.mxu0 0.0
    %230 = vmatprep.subr.mxu0 0.0
    %231 = vmatpush1.msra.mxu0 0.0
    %232 = vmatprep.subr.mxu0 0.0
    %233 = vmatpush1.msra.mxu0 0.0
    %234 = vmatprep.subr.mxu0 0.0
    %235 = vmatpush1.msra.mxu0 0.0
    %236 = vmatprep.subr.mxu0 0.0
    %237 = vmatpush1.msra.mxu0 0.0
    %238 = vmatprep.subr.mxu0 0.0
    %239 = vmatpush1.msra.mxu0 0.0
    %240 = vmatprep.subr.mxu0 0.0
    %241 = vmatpush1.msra.mxu0 0.0
    %242 = vmatprep.subr.mxu0 0.0
    %243 = vmatpush1.msra.mxu0 0.0
    %244 = vmatprep.subr.mxu0 0.0
    %245 = vmatpush1.msra.mxu0 0.0
    %246 = vmatprep.subr.mxu0 0.0
    %247 = vmatpush1.msra.mxu0 0.0
    %248 = vmatprep.subr.mxu0 0.0
    %249 = vmatpush1.msra.mxu0 0.0
    %250 = vmatprep.mubr.f32.mxu0 0.0
    %251 = vmatmul.mubr.f32.gmra.mrb[0].mxu0 %v113
    %v252 = vpop.f32.mrb[0].mxu0
    %v253 = vadd.f32 0.0, %v252
    %v254 = vpop.f32.mrb[0].mxu0
    %v255 = vadd.f32 0.0, %v254
    %256 = vdwg.mxu0
    %257 = vmatprep.subr.mxu0 %v43
    %258 = vmatpush1.msra.mxu0 %v42
    %259 = vmatprep.subr.mxu0 %v61
    %260 = vmatpush1.msra.mxu0 %v60
    %261 = vmatprep.subr.mxu0 %v79
    %262 = vmatpush1.msra.mxu0 %v78
    %263 = vmatprep.subr.mxu0 %v97
    %264 = vmatpush1.msra.mxu0 %v96
    %265 = vmatprep.subr.mxu0 %v44
    %266 = vmatpush1.msra.mxu0 %v43
    %267 = vmatprep.subr.mxu0 %v62
    %268 = vmatpush1.msra.mxu0 %v61
    %269 = vmatprep.subr.mxu0 %v80
    %270 = vmatpush1.msra.mxu0 %v79
    %271 = vmatprep.subr.mxu0 %v98
    %272 = vmatpush1.msra.mxu0 %v97
    %273 = vmatprep.subr.mxu0 %v45
    %274 = vmatpush1.msra.mxu0 %v44
    %275 = vmatprep.subr.mxu0 %v63
    %276 = vmatpush1.msra.mxu0 %v62
    %277 = vmatprep.subr.mxu0 %v81
    %278 = vmatpush1.msra.mxu0 %v80
    %279 = vmatprep.subr.mxu0 %v99
    %280 = vmatpush1.msra.mxu0 %v98
    %281 = vmatprep.subr.mxu0 0.0
    %282 = vmatpush1.msra.mxu0 0.0
    %283 = vmatprep.subr.mxu0 0.0
    %284 = vmatpush1.msra.mxu0 0.0
    %285 = vmatprep.subr.mxu0 0.0
    %286 = vmatpush1.msra.mxu0 0.0
    %287 = vmatprep.subr.mxu0 0.0
    %288 = vmatpush1.msra.mxu0 0.0
    %289 = vmatprep.subr.mxu0 0.0
    %290 = vmatpush1.msra.mxu0 0.0
    %291 = vmatprep.subr.mxu0 0.0
    %292 = vmatpush1.msra.mxu0 0.0
    %293 = vmatprep.subr.mxu0 0.0
    %294 = vmatpush1.msra.mxu0 0.0
    %295 = vmatprep.subr.mxu0 0.0
    %296 = vmatpush1.msra.mxu0 0.0
    %297 = vmatprep.subr.mxu0 0.0
    %298 = vmatpush1.msra.mxu0 0.0
    %299 = vmatprep.subr.mxu0 0.0
    %300 = vmatpush1.msra.mxu0 0.0
    %301 = vmatprep.subr.mxu0 0.0
    %302 = vmatpush1.msra.mxu0 0.0
    %303 = vmatprep.subr.mxu0 0.0
    %304 = vmatpush1.msra.mxu0 0.0
    %305 = vmatprep.subr.mxu0 0.0
    %306 = vmatpush1.msra.mxu0 0.0
    %307 = vmatprep.subr.mxu0 0.0
    %308 = vmatpush1.msra.mxu0 0.0
    %309 = vmatprep.subr.mxu0 0.0
    %310 = vmatpush1.msra.mxu0 0.0
    %311 = vmatprep.subr.mxu0 0.0
    %312 = vmatpush1.msra.mxu0 0.0
    %313 = vmatprep.subr.mxu0 0.0
    %314 = vmatpush1.msra.mxu0 0.0
    %315 = vmatprep.subr.mxu0 0.0
    %316 = vmatpush1.msra.mxu0 0.0
    %317 = vmatprep.subr.mxu0 0.0
    %318 = vmatpush1.msra.mxu0 0.0
    %319 = vmatprep.subr.mxu0 0.0
    %320 = vmatpush1.msra.mxu0 0.0
    %321 = vmatprep.mubr.f32.mxu0 0.0
    %322 = vmatmul.mubr.f32.gmra.mrb[0].mxu0 %v113
    %v323 = vpop.f32.mrb[0].mxu0
    %v324 = vadd.f32 0.0, %v323
    %v325 = vpop.f32.mrb[0].mxu0
    %v326 = vadd.f32 0.0, %v325
    %327 = vdwg.mxu0
    %328 = vmatprep.subr.mxu0 %v45
    %329 = vmatpush1.msra.mxu0 %v44
    %330 = vmatprep.subr.mxu0 %v63
    %331 = vmatpush1.msra.mxu0 %v62
    %332 = vmatprep.subr.mxu0 %v81
    %333 = vmatpush1.msra.mxu0 %v80
    %334 = vmatprep.subr.mxu0 %v99
    %335 = vmatpush1.msra.mxu0 %v98
    %336 = vmatprep.subr.mxu0 %v46
    %337 = vmatpush1.msra.mxu0 %v45
    %338 = vmatprep.subr.mxu0 %v64
    %339 = vmatpush1.msra.mxu0 %v63
    %340 = vmatprep.subr.mxu0 %v82
    %341 = vmatpush1.msra.mxu0 %v81
    %342 = vmatprep.subr.mxu0 %v100
    %343 = vmatpush1.msra.mxu0 %v99
    %344 = vmatprep.subr.mxu0 %v47
    %345 = vmatpush1.msra.mxu0 %v46
    %346 = vmatprep.subr.mxu0 %v65
    %347 = vmatpush1.msra.mxu0 %v64
    %348 = vmatprep.subr.mxu0 %v83
    %349 = vmatpush1.msra.mxu0 %v82
    %350 = vmatprep.subr.mxu0 %v101
    %351 = vmatpush1.msra.mxu0 %v100
    %352 = vmatprep.subr.mxu0 0.0
    %353 = vmatpush1.msra.mxu0 0.0
    %354 = vmatprep.subr.mxu0 0.0
    %355 = vmatpush1.msra.mxu0 0.0
    %356 = vmatprep.subr.mxu0 0.0
    %357 = vmatpush1.msra.mxu0 0.0
    %358 = vmatprep.subr.mxu0 0.0
    %359 = vmatpush1.msra.mxu0 0.0
    %360 = vmatprep.subr.mxu0 0.0
    %361 = vmatpush1.msra.mxu0 0.0
    %362 = vmatprep.subr.mxu0 0.0
    %363 = vmatpush1.msra.mxu0 0.0
    %364 = vmatprep.subr.mxu0 0.0
    %365 = vmatpush1.msra.mxu0 0.0
    %366 = vmatprep.subr.mxu0 0.0
    %367 = vmatpush1.msra.mxu0 0.0
    %368 = vmatprep.subr.mxu0 0.0
    %369 = vmatpush1.msra.mxu0 0.0
    %370 = vmatprep.subr.mxu0 0.0
    %371 = vmatpush1.msra.mxu0 0.0
    %372 = vmatprep.subr.mxu0 0.0
    %373 = vmatpush1.msra.mxu0 0.0
    %374 = vmatprep.subr.mxu0 0.0
    %375 = vmatpush1.msra.mxu0 0.0
    %376 = vmatprep.subr.mxu0 0.0
    %377 = vmatpush1.msra.mxu0 0.0
    %378 = vmatprep.subr.mxu0 0.0
    %379 = vmatpush1.msra.mxu0 0.0
    %380 = vmatprep.subr.mxu0 0.0
    %381 = vmatpush1.msra.mxu0 0.0
    %382 = vmatprep.subr.mxu0 0.0
    %383 = vmatpush1.msra.mxu0 0.0
    %384 = vmatprep.subr.mxu0 0.0
    %385 = vmatpush1.msra.mxu0 0.0
    %386 = vmatprep.subr.mxu0 0.0
    %387 = vmatpush1.msra.mxu0 0.0
    %388 = vmatprep.subr.mxu0 0.0
    %389 = vmatpush1.msra.mxu0 0.0
    %390 = vmatprep.subr.mxu0 0.0
    %391 = vmatpush1.msra.mxu0 0.0
    %392 = vmatprep.mubr.f32.mxu0 0.0
    %393 = vmatmul.mubr.f32.gmra.mrb[0].mxu0 %v113
    %v394 = vpop.f32.mrb[0].mxu0
    %v395 = vadd.f32 0.0, %v394
    %v396 = vpop.f32.mrb[0].mxu0
    %v397 = vadd.f32 0.0, %v396
    %398 = vdwg.mxu0
    %399 = vmatprep.subr.mxu0 %v47
    %400 = vmatpush1.msra.mxu0 %v46
    %401 = vmatprep.subr.mxu0 %v65
    %402 = vmatpush1.msra.mxu0 %v64
    %403 = vmatprep.subr.mxu0 %v83
    %404 = vmatpush1.msra.mxu0 %v82
    %405 = vmatprep.subr.mxu0 %v101
    %406 = vmatpush1.msra.mxu0 %v100
    %407 = vmatprep.subr.mxu0 %v48
    %408 = vmatpush1.msra.mxu0 %v47
    %409 = vmatprep.subr.mxu0 %v66
    %410 = vmatpush1.msra.mxu0 %v65
    %411 = vmatprep.subr.mxu0 %v84
    %412 = vmatpush1.msra.mxu0 %v83
    %413 = vmatprep.subr.mxu0 %v102
    %414 = vmatpush1.msra.mxu0 %v101
    %415 = vmatprep.subr.mxu0 %v49
    %416 = vmatpush1.msra.mxu0 %v48
    %417 = vmatprep.subr.mxu0 %v67
    %418 = vmatpush1.msra.mxu0 %v66
    %419 = vmatprep.subr.mxu0 %v85
    %420 = vmatpush1.msra.mxu0 %v84
    %421 = vmatprep.subr.mxu0 %v103
    %422 = vmatpush1.msra.mxu0 %v102
    %423 = vmatprep.subr.mxu0 0.0
    %424 = vmatpush1.msra.mxu0 0.0
    %425 = vmatprep.subr.mxu0 0.0
    %426 = vmatpush1.msra.mxu0 0.0
    %427 = vmatprep.subr.mxu0 0.0
    %428 = vmatpush1.msra.mxu0 0.0
    %429 = vmatprep.subr.mxu0 0.0
    %430 = vmatpush1.msra.mxu0 0.0
    %431 = vmatprep.subr.mxu0 0.0
    %432 = vmatpush1.msra.mxu0 0.0
    %433 = vmatprep.subr.mxu0 0.0
    %434 = vmatpush1.msra.mxu0 0.0
    %435 = vmatprep.subr.mxu0 0.0
    %436 = vmatpush1.msra.mxu0 0.0
    %437 = vmatprep.subr.mxu0 0.0
    %438 = vmatpush1.msra.mxu0 0.0
    %439 = vmatprep.subr.mxu0 0.0
    %440 = vmatpush1.msra.mxu0 0.0
    %441 = vmatprep.subr.mxu0 0.0
    %442 = vmatpush1.msra.mxu0 0.0
    %443 = vmatprep.subr.mxu0 0.0
    %444 = vmatpush1.msra.mxu0 0.0
    %445 = vmatprep.subr.mxu0 0.0
    %446 = vmatpush1.msra.mxu0 0.0
    %447 = vmatprep.subr.mxu0 0.0
    %448 = vmatpush1.msra.mxu0 0.0
    %449 = vmatprep.subr.mxu0 0.0
    %450 = vmatpush1.msra.mxu0 0.0
    %451 = vmatprep.subr.mxu0 0.0
    %452 = vmatpush1.msra.mxu0 0.0
    %453 = vmatprep.subr.mxu0 0.0
    %454 = vmatpush1.msra.mxu0 0.0
    %455 = vmatprep.subr.mxu0 0.0
    %456 = vmatpush1.msra.mxu0 0.0
    %457 = vmatprep.subr.mxu0 0.0
    %458 = vmatpush1.msra.mxu0 0.0
    %459 = vmatprep.subr.mxu0 0.0
    %460 = vmatpush1.msra.mxu0 0.0
    %461 = vmatprep.subr.mxu0 0.0
    %462 = vmatpush1.msra.mxu0 0.0
    %463 = vmatprep.mubr.f32.mxu0 0.0
    %464 = vmatmul.mubr.f32.gmra.mrb[0].mxu0 %v113
    %v465 = vpop.f32.mrb[0].mxu0
    %v466 = vadd.f32 0.0, %v465
    %v467 = vpop.f32.mrb[0].mxu0
    %v468 = vadd.f32 0.0, %v467
    %469 = vdwg.mxu0
    %470 = vmatprep.subr.mxu0 %v49
    %471 = vmatpush1.msra.mxu0 %v48
    %472 = vmatprep.subr.mxu0 %v67
    %473 = vmatpush1.msra.mxu0 %v66
    %474 = vmatprep.subr.mxu0 %v85
    %475 = vmatpush1.msra.mxu0 %v84
    %476 = vmatprep.subr.mxu0 %v103
    %477 = vmatpush1.msra.mxu0 %v102
    %478 = vmatprep.subr.mxu0 %v50
    %479 = vmatpush1.msra.mxu0 %v49
    %480 = vmatprep.subr.mxu0 %v68
    %481 = vmatpush1.msra.mxu0 %v67
    %482 = vmatprep.subr.mxu0 %v86
    %483 = vmatpush1.msra.mxu0 %v85
    %484 = vmatprep.subr.mxu0 %v104
    %485 = vmatpush1.msra.mxu0 %v103
    %486 = vmatprep.subr.mxu0 %v51
    %487 = vmatpush1.msra.mxu0 %v50
    %488 = vmatprep.subr.mxu0 %v69
    %489 = vmatpush1.msra.mxu0 %v68
    %490 = vmatprep.subr.mxu0 %v87
    %491 = vmatpush1.msra.mxu0 %v86
    %492 = vmatprep.subr.mxu0 %v105
    %493 = vmatpush1.msra.mxu0 %v104
    %494 = vmatprep.subr.mxu0 0.0
    %495 = vmatpush1.msra.mxu0 0.0
    %496 = vmatprep.subr.mxu0 0.0
    %497 = vmatpush1.msra.mxu0 0.0
    %498 = vmatprep.subr.mxu0 0.0
    %499 = vmatpush1.msra.mxu0 0.0
    %500 = vmatprep.subr.mxu0 0.0
    %501 = vmatpush1.msra.mxu0 0.0
    %502 = vmatprep.subr.mxu0 0.0
    %503 = vmatpush1.msra.mxu0 0.0
    %504 = vmatprep.subr.mxu0 0.0
    %505 = vmatpush1.msra.mxu0 0.0
    %506 = vmatprep.subr.mxu0 0.0
    %507 = vmatpush1.msra.mxu0 0.0
    %508 = vmatprep.subr.mxu0 0.0
    %509 = vmatpush1.msra.mxu0 0.0
    %510 = vmatprep.subr.mxu0 0.0
    %511 = vmatpush1.msra.mxu0 0.0
    %512 = vmatprep.subr.mxu0 0.0
    %513 = vmatpush1.msra.mxu0 0.0
    %514 = vmatprep.subr.mxu0 0.0
    %515 = vmatpush1.msra.mxu0 0.0
    %516 = vmatprep.subr.mxu0 0.0
    %517 = vmatpush1.msra.mxu0 0.0
    %518 = vmatprep.subr.mxu0 0.0
    %519 = vmatpush1.msra.mxu0 0.0
    %520 = vmatprep.subr.mxu0 0.0
    %521 = vmatpush1.msra.mxu0 0.0
    %522 = vmatprep.subr.mxu0 0.0
    %523 = vmatpush1.msra.mxu0 0.0
    %524 = vmatprep.subr.mxu0 0.0
    %525 = vmatpush1.msra.mxu0 0.0
    %526 = vmatprep.subr.mxu0 0.0
    %527 = vmatpush1.msra.mxu0 0.0
    %528 = vmatprep.subr.mxu0 0.0
    %529 = vmatpush1.msra.mxu0 0.0
    %530 = vmatprep.subr.mxu0 0.0
    %531 = vmatpush1.msra.mxu0 0.0
    %532 = vmatprep.subr.mxu0 0.0
    %533 = vmatpush1.msra.mxu0 0.0
    %534 = vmatprep.mubr.f32.mxu0 0.0
    %535 = vmatmul.mubr.f32.gmra.mrb[0].mxu0 %v113
    %v536 = vpop.f32.mrb[0].mxu0
    %v537 = vadd.f32 0.0, %v536
    %v538 = vpop.f32.mrb[0].mxu0
    %v539 = vadd.f32 0.0, %v538
    %540 = vdwg.mxu0
    %541 = vmatprep.subr.mxu0 %v51
    %542 = vmatpush1.msra.mxu0 %v50
    %543 = vmatprep.subr.mxu0 %v69
    %544 = vmatpush1.msra.mxu0 %v68
    %545 = vmatprep.subr.mxu0 %v87
    %546 = vmatpush1.msra.mxu0 %v86
    %547 = vmatprep.subr.mxu0 %v105
    %548 = vmatpush1.msra.mxu0 %v104
    %549 = vmatprep.subr.mxu0 %v52
    %550 = vmatpush1.msra.mxu0 %v51
    %551 = vmatprep.subr.mxu0 %v70
    %552 = vmatpush1.msra.mxu0 %v69
    %553 = vmatprep.subr.mxu0 %v88
    %554 = vmatpush1.msra.mxu0 %v87
    %555 = vmatprep.subr.mxu0 %v106
    %556 = vmatpush1.msra.mxu0 %v105
    %557 = vmatprep.subr.mxu0 %v53
    %558 = vmatpush1.msra.mxu0 %v52
    %559 = vmatprep.subr.mxu0 %v71
    %560 = vmatpush1.msra.mxu0 %v70
    %561 = vmatprep.subr.mxu0 %v89
    %562 = vmatpush1.msra.mxu0 %v88
    %563 = vmatprep.subr.mxu0 %v107
    %564 = vmatpush1.msra.mxu0 %v106
    %565 = vmatprep.subr.mxu0 0.0
    %566 = vmatpush1.msra.mxu0 0.0
    %567 = vmatprep.subr.mxu0 0.0
    %568 = vmatpush1.msra.mxu0 0.0
    %569 = vmatprep.subr.mxu0 0.0
    %570 = vmatpush1.msra.mxu0 0.0
    %571 = vmatprep.subr.mxu0 0.0
    %572 = vmatpush1.msra.mxu0 0.0
    %573 = vmatprep.subr.mxu0 0.0
    %574 = vmatpush1.msra.mxu0 0.0
    %575 = vmatprep.subr.mxu0 0.0
    %576 = vmatpush1.msra.mxu0 0.0
    %577 = vmatprep.subr.mxu0 0.0
    %578 = vmatpush1.msra.mxu0 0.0
    %579 = vmatprep.subr.mxu0 0.0
    %580 = vmatpush1.msra.mxu0 0.0
    %581 = vmatprep.subr.mxu0 0.0
    %582 = vmatpush1.msra.mxu0 0.0
    %583 = vmatprep.subr.mxu0 0.0
    %584 = vmatpush1.msra.mxu0 0.0
    %585 = vmatprep.subr.mxu0 0.0
    %586 = vmatpush1.msra.mxu0 0.0
    %587 = vmatprep.subr.mxu0 0.0
    %588 = vmatpush1.msra.mxu0 0.0
    %589 = vmatprep.subr.mxu0 0.0
    %590 = vmatpush1.msra.mxu0 0.0
    %591 = vmatprep.subr.mxu0 0.0
    %592 = vmatpush1.msra.mxu0 0.0
    %593 = vmatprep.subr.mxu0 0.0
    %594 = vmatpush1.msra.mxu0 0.0
    %595 = vmatprep.subr.mxu0 0.0
    %596 = vmatpush1.msra.mxu0 0.0
    %597 = vmatprep.subr.mxu0 0.0
    %598 = vmatpush1.msra.mxu0 0.0
    %599 = vmatprep.subr.mxu0 0.0
    %600 = vmatpush1.msra.mxu0 0.0
    %601 = vmatprep.subr.mxu0 0.0
    %602 = vmatpush1.msra.mxu0 0.0
    %603 = vmatprep.subr.mxu0 0.0
    %604 = vmatpush1.msra.mxu0 0.0
    %605 = vmatprep.mubr.f32.mxu0 0.0
    %606 = vmatmul.mubr.f32.gmra.mrb[0].mxu0 %v113
    %v607 = vpop.f32.mrb[0].mxu0
    %v608 = vadd.f32 0.0, %v607
    %v609 = vpop.f32.mrb[0].mxu0
    %v610 = vadd.f32 0.0, %v609
    %611 = vdwg.mxu0
    %612 = vmatprep.subr.mxu0 %v53
    %613 = vmatpush1.msra.mxu0 %v52
    %614 = vmatprep.subr.mxu0 %v71
    %615 = vmatpush1.msra.mxu0 %v70
    %616 = vmatprep.subr.mxu0 %v89
    %617 = vmatpush1.msra.mxu0 %v88
    %618 = vmatprep.subr.mxu0 %v107
    %619 = vmatpush1.msra.mxu0 %v106
    %620 = vmatprep.subr.mxu0 %v54
    %621 = vmatpush1.msra.mxu0 %v53
    %622 = vmatprep.subr.mxu0 %v72
    %623 = vmatpush1.msra.mxu0 %v71
    %624 = vmatprep.subr.mxu0 %v90
    %625 = vmatpush1.msra.mxu0 %v89
    %626 = vmatprep.subr.mxu0 %v108
    %627 = vmatpush1.msra.mxu0 %v107
    %628 = vmatprep.subr.mxu0 %v55
    %629 = vmatpush1.msra.mxu0 %v54
    %630 = vmatprep.subr.mxu0 %v73
    %631 = vmatpush1.msra.mxu0 %v72
    %632 = vmatprep.subr.mxu0 %v91
    %633 = vmatpush1.msra.mxu0 %v90
    %634 = vmatprep.subr.mxu0 %v109
    %635 = vmatpush1.msra.mxu0 %v108
    %636 = vmatprep.subr.mxu0 0.0
    %637 = vmatpush1.msra.mxu0 0.0
    %638 = vmatprep.subr.mxu0 0.0
    %639 = vmatpush1.msra.mxu0 0.0
    %640 = vmatprep.subr.mxu0 0.0
    %641 = vmatpush1.msra.mxu0 0.0
    %642 = vmatprep.subr.mxu0 0.0
    %643 = vmatpush1.msra.mxu0 0.0
    %644 = vmatprep.subr.mxu0 0.0
    %645 = vmatpush1.msra.mxu0 0.0
    %646 = vmatprep.subr.mxu0 0.0
    %647 = vmatpush1.msra.mxu0 0.0
    %648 = vmatprep.subr.mxu0 0.0
    %649 = vmatpush1.msra.mxu0 0.0
    %650 = vmatprep.subr.mxu0 0.0
    %651 = vmatpush1.msra.mxu0 0.0
    %652 = vmatprep.subr.mxu0 0.0
    %653 = vmatpush1.msra.mxu0 0.0
    %654 = vmatprep.subr.mxu0 0.0
    %655 = vmatpush1.msra.mxu0 0.0
    %656 = vmatprep.subr.mxu0 0.0
    %657 = vmatpush1.msra.mxu0 0.0
    %658 = vmatprep.subr.mxu0 0.0
    %659 = vmatpush1.msra.mxu0 0.0
    %660 = vmatprep.subr.mxu0 0.0
    %661 = vmatpush1.msra.mxu0 0.0
    %662 = vmatprep.subr.mxu0 0.0
    %663 = vmatpush1.msra.mxu0 0.0
    %664 = vmatprep.subr.mxu0 0.0
    %665 = vmatpush1.msra.mxu0 0.0
    %666 = vmatprep.subr.mxu0 0.0
    %667 = vmatpush1.msra.mxu0 0.0
    %668 = vmatprep.subr.mxu0 0.0
    %669 = vmatpush1.msra.mxu0 0.0
    %670 = vmatprep.subr.mxu0 0.0
    %671 = vmatpush1.msra.mxu0 0.0
    %672 = vmatprep.subr.mxu0 0.0
    %673 = vmatpush1.msra.mxu0 0.0
    %674 = vmatprep.subr.mxu0 0.0
    %675 = vmatpush1.msra.mxu0 0.0
    %676 = vmatprep.mubr.f32.mxu0 0.0
    %677 = vmatmul.mubr.f32.gmra.mrb[0].mxu0 %v113
    %v678 = vpop.f32.mrb[0].mxu0
    %v679 = vadd.f32 0.0, %v678
    %v680 = vpop.f32.mrb[0].mxu0
    %v681 = vadd.f32 0.0, %v680
    %682 = vdwg.mxu0
    %683 = vst [vmem:[#allocation7] sm:$0xff] %v182
    %684 = vst [vmem:[#allocation7 + $0x8] sm:$0xff] %v184
    %685 = vst [vmem:[#allocation7 + $0x10] sm:$0xff] %v253
    %686 = vst [vmem:[#allocation7 + $0x18] sm:$0xff] %v255
    %687 = vst [vmem:[#allocation7 + $0x20] sm:$0xff] %v324
    %688 = vst [vmem:[#allocation7 + $0x28] sm:$0xff] %v326
    %689 = vst [vmem:[#allocation7 + $0x30] sm:$0xff] %v395
    %690 = vst [vmem:[#allocation7 + $0x38] sm:$0xff] %v397
    %691 = vst [vmem:[#allocation7 + $0x40] sm:$0xff] %v466
    %692 = vst [vmem:[#allocation7 + $0x48] sm:$0xff] %v468
    %693 = vst [vmem:[#allocation7 + $0x50] sm:$0xff] %v537
    %694 = vst [vmem:[#allocation7 + $0x58] sm:$0xff] %v539
    %695 = vst [vmem:[#allocation7 + $0x60] sm:$0xff] %v608
    %696 = vst [vmem:[#allocation7 + $0x68] sm:$0xff] %v610
    %697 = vst [vmem:[#allocation7 + $0x70] sm:$0xff] %v679
    %698 = vst [vmem:[#allocation7 + $0x78] sm:$0xff] %v681
    // Predicated region
    $region18: #{tpu_custom_call.1} parent=1 // pred_check
      _
    $region19: #{tpu_custom_call.1} parent=1 // pred_check_branch
      %700 = sbr.rel (0) target = $region21
    $region20: #{tpu_custom_call.1} parent=1 // pred_region
      %s702 = ssub.s32 2048, 2048
      %703 = vsyncadd [#allocation4], %s702
      %s705 = sshll.u32 [#allocation7], 4
      %s706 = int_to_ptr.vmem [resolvable:$true] %s705
      %708 = dma.vmem_to_hbm [thread:$0]  %s706, 2048, %s2, [#allocation4]
    $region21: #{tpu_custom_call.1} parent=1 // pred_fallthru
      _
    // Predicated region
    $region22: #{tpu_custom_call.1} parent=1 // pred_check
      _
    $region23: #{tpu_custom_call.1} parent=1 // pred_check_branch
      %710 = sbr.rel (0) target = $region25
    $region24: #{tpu_custom_call.1} parent=1 // pred_region
      %711 = dma.done [#allocation4], 2048
    $region25: #{tpu_custom_call.1} parent=1 // pred_fallthru
      _
    %712 = vsyncpa [#allocation3], 1
    %713 = vsyncpa [#allocation6], 1
    %714 = vsyncpa [#allocation4], 1

</llo_original>
